<compile_context>
chip_gen: v6e
topology: v6e:2x2x1
jax: 0.10.0
libtpu: 0.0.40
codegen_flags: <defaults>
</compile_context>

<pallas_src>
import functools

import jax
import jax.numpy as jnp
from jax.experimental import pallas as pl
from jax.experimental.pallas import tpu as pltpu

LANE = 128
SUBLANE = 8
_TARGET_BLOCK_BYTES = 2 * 1024 * 1024   # per-input, per-buffer block (>=85% HBM roofline v5e/v6e)
_CHUNK_VREGS = 8                        # ~per-input vreg working set of one inner-loop chunk


def _round_down(x, m):
    return (x // m) * m


def _largest_divisor_leq(n, cap, step=1):
    """Largest d <= cap with n % d == 0 and step | d; None if it would shrink the block > 2x."""
    d = _round_down(min(cap, n), step)
    while d >= step:
        if n % d == 0:
            return d if 2 * d >= cap else None
        d -= step
    return None


def _dice_sums_kernel(s_ref, t_ref, o_ref, *, sub_n, sub_h, acc_sub, w_fold,
                      mask_axis, n_total, h_total, tile_n, tile_h, unroll):
    """Grid = (class, batch-block, row-block).

    s_ref, t_ref : (tile_n, tile_h, W) blocks of the current class (class dim squeezed).
    o_ref        : (3, acc_sub, w_acc) f32 accumulator, resident across the row-block
                   ("arbitrary") axis.  Rows: 0 -> sum(s*t), 1 -> sum(s*s), 2 -> sum(t*t).
    """
    W = s_ref.shape[2]
    lane_groups = W // LANE if w_fold else 1
    r = sub_h // acc_sub
    h_chunks = tile_h // sub_h
    n_chunks = (tile_n // sub_n) * h_chunks

    @pl.when(pl.program_id(2) == 0)
    def _():
        o_ref[...] = jnp.zeros_like(o_ref)

    if mask_axis == 0:          # ragged batch edge block
        limit = n_total - pl.program_id(1) * tile_n
    elif mask_axis == 1:        # ragged row edge block
        limit = h_total - pl.program_id(2) * tile_h
    else:
        limit = None

    def reduce_chunk(p):
        # p: (sub_n, sub_h, W) f32 -> (acc_sub, w_acc); pure vreg-vreg (VPU) adds only.
        if w_fold and lane_groups > 1:
            q = p[..., :LANE]
            for g in range(1, lane_groups):               # 128-aligned lane-group folds (free slices)
                q = q + p[..., g * LANE:(g + 1) * LANE]
        else:
            q = p
        q = q.reshape(sub_n, r, acc_sub, q.shape[-1])     # sublane-tile split: layout-free
        return q.sum(axis=(0, 1))

    def chunk_sums(j):
        jn = j // h_chunks
        jh = j % h_chunks
        n0 = jn * sub_n
        h0 = jh * sub_h
        if not isinstance(n0, int):
            n0 = pl.multiple_of(n0, sub_n)
            h0 = pl.multiple_of(h0, sub_h)
        s = s_ref[pl.ds(n0, sub_n), pl.ds(h0, sub_h), :].astype(jnp.float32)
        t = t_ref[pl.ds(n0, sub_n), pl.ds(h0, sub_h), :].astype(jnp.float32)
        if mask_axis is not None:
            ids = jax.lax.broadcasted_iota(jnp.int32, (sub_n, sub_h, W), mask_axis)
            ids = ids + (n0 if mask_axis == 0 else h0)
            valid = ids < limit
            s = jnp.where(valid, s, 0.0)
            t = jnp.where(valid, t, 0.0)
        return reduce_chunk(s * t), reduce_chunk(s * s), reduce_chunk(t * t)

    if n_chunks == 1:
        st, ss, tt = chunk_sums(0)
    else:
        def body(j, carry):
            a, b, c = carry
            d, e, f = chunk_sums(j)
            return a + d, b + e, c + f

        w_acc = o_ref.shape[2]
        zero = jnp.zeros((acc_sub, w_acc), jnp.float32)
        st, ss, tt = jax.lax.fori_loop(0, n_chunks, body, (zero, zero, zero),
                                       unroll=unroll)

    o_ref[...] += jnp.stack([st, ss, tt], axis=0)


def _choose_tiling(N, C, H, W, itemsize):
    """Pick (tile_n, tile_h) so one block is ~_TARGET_BLOCK_BYTES (VMEM-padded)."""
    lane_groups = pl.cdiv(W, LANE)
    w_pad_bytes = lane_groups * LANE * itemsize
    rows_target = max(1, _TARGET_BLOCK_BYTES // w_pad_bytes)
    plane_bytes = pl.cdiv(H, SUBLANE) * SUBLANE * w_pad_bytes
    plane_vregs = pl.cdiv(H, SUBLANE) * lane_groups

    if plane_bytes <= _TARGET_BLOCK_BYTES and (H % SUBLANE == 0 or plane_vregs <= _CHUNK_VREGS):
        # Whole (n, c) planes fit: block across the batch dim to reach the target size.
        tile_h = H
        nmax = max(1, min(N, _TARGET_BLOCK_BYTES // plane_bytes))
        if C == 1 and N >= 2:
            nmax = min(nmax, pl.cdiv(N, 2))   # keep >=2 parallel blocks for megacore (v7x)
        d = _largest_divisor_leq(N, nmax)      # prefer an exact divisor -> no edge masking
        tile_n = d if d is not None else nmax
    else:
        tile_n = 1
        if H <= SUBLANE:
            tile_h = H
        else:
            cap = max(SUBLANE, min(_round_down(H, SUBLANE), _round_down(rows_target, SUBLANE)))
            d = _largest_divisor_leq(H, cap, step=SUBLANE) if H % SUBLANE == 0 else None
            tile_h = d if d is not None else cap
    return tile_n, tile_h


def _choose_chunk(tile_n, tile_h, lane_groups):
    """Pick the per-loop-iteration chunk (sub_n, sub_h), ~_CHUNK_VREGS vregs per input."""
    plane_vregs = pl.cdiv(tile_h, SUBLANE) * lane_groups
    if tile_n > 1 and plane_vregs <= _CHUNK_VREGS:
        # Chunk spans several full (tile_h, W) planes.
        sub_h = tile_h
        sub_n = max(1, min(tile_n, _CHUNK_VREGS // plane_vregs))
        while tile_n % sub_n:
            sub_n -= 1
    else:
        sub_n = 1
        if tile_h % SUBLANE == 0:
            g = max(1, min(tile_h // SUBLANE, _CHUNK_VREGS // max(1, lane_groups)))
            sub_h = g * SUBLANE
            while tile_h % sub_h:
                sub_h -= SUBLANE
        else:
            sub_h = tile_h                    # tiny / odd H: single h-chunk
    return sub_n, sub_h


def _dice_class_sums(score, target):
    """score / target: (N, C, H, W), same shape, any float/int dtype.

    Returns (C, 3) float32 with columns [sum(s*t), sum(s*s), sum(t*t)] per class.
    """
    assert score.shape == target.shape and score.ndim == 4
    N, C, H, W = score.shape
    itemsize = max(jnp.dtype(score.dtype).itemsize, jnp.dtype(target.dtype).itemsize)
    lane_groups = pl.cdiv(W, LANE)

    tile_n, tile_h = _choose_tiling(N, C, H, W, itemsize)
    sub_n, sub_h = _choose_chunk(tile_n, tile_h, lane_groups)

    NB = pl.cdiv(N, tile_n)
    KH = pl.cdiv(H, tile_h)

    acc_sub = SUBLANE if sub_h % SUBLANE == 0 else sub_h
    w_fold = (W % LANE == 0)
    w_acc = LANE if w_fold else W

    if N % tile_n:
        mask_axis = 0
    elif H % tile_h:
        mask_axis = 1
    else:
        mask_axis = None

    n_chunks = (tile_n // sub_n) * (tile_h // sub_h)
    unroll = True if n_chunks <= 8 else 4

    kernel = functools.partial(
        _dice_sums_kernel,
        sub_n=sub_n, sub_h=sub_h, acc_sub=acc_sub, w_fold=w_fold,
        mask_axis=mask_axis, n_total=N, h_total=H,
        tile_n=tile_n, tile_h=tile_h, unroll=unroll)

    out = pl.pallas_call(
        kernel,
        out_shape=jax.ShapeDtypeStruct((C, NB, 3, acc_sub, w_acc), jnp.float32),
        grid_spec=pltpu.PrefetchScalarGridSpec(
            num_scalar_prefetch=0,
            grid=(C, NB, KH),
            in_specs=[
                pl.BlockSpec((tile_n, None, tile_h, W), lambda c, nb, kh: (nb, c, kh, 0)),
                pl.BlockSpec((tile_n, None, tile_h, W), lambda c, nb, kh: (nb, c, kh, 0)),
            ],
            out_specs=pl.BlockSpec((None, None, 3, acc_sub, w_acc),
                                   lambda c, nb, kh: (c, nb, 0, 0, 0)),
        ),
        compiler_params=pltpu.CompilerParams(
            dimension_semantics=("parallel", "parallel", "arbitrary"),
            vmem_limit_bytes=32 * 1024 * 1024,
        ),
    )(score, target)

    # Tiny final cross-lane reduce (C * NB * 3 * acc_sub * w_acc elements) in XLA.
    return jnp.sum(out, axis=(1, 3, 4))                   # (C, 3)


class DiceLoss:
    """JAX/Pallas port of the PyTorch DiceLoss module (forward pass)."""

    def __init__(self, n_classes, weight=None):
        self.n_classes = n_classes
        self.weight = weight

    def _one_hot_encoder(self, input_tensor):
        # (N, H, W) int labels -> (N, C, H, W) float one-hot (like the PyTorch helper).
        # TODO(synk): add a label-map fast path that computes (labels == c) in-kernel to
        # avoid materializing the C-channel one-hot in HBM.
        return jax.nn.one_hot(input_tensor, self.n_classes, axis=1, dtype=jnp.float32)

    def __call__(self, inputs, target, softmax=False):
        if softmax:
            # TODO(synk): fuse the channel softmax into the Pallas kernel (grid (N, K),
            # block (C, tile_h, W)) to save one full HBM write + read of the score tensor.
            inputs = jax.nn.softmax(inputs, axis=1)
        weight = self.weight if self.weight is not None else [1.0] * self.n_classes
        assert inputs.shape == target.shape, (
            'predict {} & target {} shape do not match'.format(inputs.shape, target.shape))
        weight = jnp.asarray(weight, jnp.float32)

        N, C, H, W = inputs.shape
        assert C == self.n_classes

        sums = _dice_class_sums(inputs, target)           # (C, 3) f32
        intersect, z_sum, y_sum = sums[:, 0], sums[:, 1], sums[:, 2]

        smooth = 1e-05
        dice = 1.0 - (2.0 * intersect + smooth) / (z_sum + y_sum + smooth)  # per-class
        loss = jnp.sum(dice * weight) / self.n_classes
        return loss


def _reference_dice_loss(inputs, target, n_classes, weight=None, softmax=False):
    """Pure-JAX reference mirroring the PyTorch forward, for sanity checks."""
    if softmax:
        inputs = jax.nn.softmax(inputs, axis=1)
    if weight is None:
        weight = [1.0] * n_classes
    smooth = 1e-05
    loss = 0.0
    for i in range(n_classes):
        s = inputs[:, i].astype(jnp.float32)
        t = target[:, i].astype(jnp.float32)
        intersect = jnp.sum(s * t)
        y_sum = jnp.sum(t * t)
        z_sum = jnp.sum(s * s)
        dice = 1.0 - (2.0 * intersect + smooth) / (z_sum + y_sum + smooth)
        loss = loss + dice * weight[i]
    return loss / n_classes


if __name__ == "__main__":
    key = jax.random.PRNGKey(0)

    # --- check 1: typical small shapes (softmaxed scores + one-hot target) --------------
    N, C, H, W = 2, 4, 16, 16
    k1, k2, key = jax.random.split(key, 3)
    logits = jax.random.normal(k1, (N, C, H, W), dtype=jnp.float32)
    probs = jax.nn.softmax(logits, axis=1)
    labels = jax.random.randint(k2, (N, H, W), 0, C)
    target = jax.nn.one_hot(labels, C, axis=1, dtype=jnp.float32)
    dl = DiceLoss(n_classes=C)
    loss = jax.block_until_ready(dl(probs, target, softmax=False))
    ref = jax.block_until_ready(_reference_dice_loss(probs, target, C))
    assert jnp.allclose(loss, ref, rtol=1e-4, atol=1e-6), (loss, ref)

    # --- check 2: ragged batch (exercises in-kernel edge-block masking, C == 1) ---------
    N, C, H, W = 5, 1, 8, 24
    k1, k2, key = jax.random.split(key, 3)
    s2 = jax.random.uniform(k1, (N, C, H, W), dtype=jnp.float32)
    t2 = jax.random.uniform(k2, (N, C, H, W), dtype=jnp.float32)
    dl2 = DiceLoss(n_classes=C)
    loss2 = jax.block_until_ready(dl2(s2, t2))
    ref2 = jax.block_until_ready(_reference_dice_loss(s2, t2, C))
    assert jnp.allclose(loss2, ref2, rtol=1e-4, atol=1e-6), (loss2, ref2)

    # --- check 3: chunked in-kernel loop + lane folding + class weights -----------------
    N, C, H, W = 2, 3, 64, 256
    k1, k2, key = jax.random.split(key, 3)
    s3 = jax.random.uniform(k1, (N, C, H, W), dtype=jnp.float32)
    t3 = jax.random.uniform(k2, (N, C, H, W), dtype=jnp.float32)
    w3 = [0.2, 0.3, 0.5]
    dl3 = DiceLoss(n_classes=C, weight=w3)
    loss3 = jax.block_until_ready(dl3(s3, t3))
    ref3 = jax.block_until_ready(_reference_dice_loss(s3, t3, C, weight=w3))
    assert jnp.allclose(loss3, ref3, rtol=1e-4, atol=1e-6), (loss3, ref3)

    print("KERNEL_OK")
</pallas_src>

<mosaic_0001>
module attributes {stable_mosaic.version = 11 : i64} {
  func.func @_dice_sums_kernel(%arg0: i32, %arg1: i32, %arg2: i32, %arg3: memref<2x1x16x16xf32, #tpu.memory_space<vmem>>, %arg4: memref<2x1x16x16xf32, #tpu.memory_space<vmem>>, %arg5: memref<1x1x3x8x16xf32, #tpu.memory_space<vmem>>) attributes {dimension_semantics = [#tpu.dimension_semantics<parallel>, #tpu.dimension_semantics<parallel>, #tpu.dimension_semantics<arbitrary>], iteration_bounds = array<i64: 4, 1, 1>, scalar_prefetch = 0 : i64, scratch_operands = 0 : i64, tpu.core_type = #tpu.core_type<tc>, window_params = [{transform_indices = @transform_0, window_bounds = array<i64: 2, 1, 16, 16>}, {transform_indices = @transform_1, window_bounds = array<i64: 2, 1, 16, 16>}, {transform_indices = @transform_2, window_bounds = array<i64: 1, 1, 3, 8, 16>}]} {
    %c0_i32 = arith.constant 0 : i32
    %0 = arith.cmpi eq, %arg2, %c0_i32 : i32
    %1 = arith.extui %0 : i1 to i32
    %c0_i32_0 = arith.constant 0 : i32
    %2 = arith.cmpi ne, %1, %c0_i32_0 : i32
    scf.if %2 {
      %cst_20 = arith.constant 0.000000e+00 : f32
      %26 = vector.broadcast %cst_20 : f32 to vector<3x8x16xf32>
      %c0_21 = arith.constant 0 : index
      %c0_22 = arith.constant 0 : index
      %c0_23 = arith.constant 0 : index
      %c0_24 = arith.constant 0 : index
      %c0_25 = arith.constant 0 : index
      %27 = vector.load %arg5[%c0_21, %c0_22, %c0_23, %c0_24, %c0_25] : memref<1x1x3x8x16xf32, #tpu.memory_space<vmem>>, vector<1x1x3x8x16xf32>
      %28 = vector.shape_cast %27 : vector<1x1x3x8x16xf32> to vector<3x8x16xf32>
      %29 = vector.shape_cast %26 : vector<3x8x16xf32> to vector<1x1x3x8x16xf32>
      tpu.vector_store %arg5[%c0_21, %c0_22, %c0_23, %c0_24, %c0_25], %29 {strides = array<i32>} : memref<1x1x3x8x16xf32, #tpu.memory_space<vmem>>, vector<1x1x3x8x16xf32>,
    } else {
    }
    %c0 = arith.constant 0 : index
    %c0_1 = arith.constant 0 : index
    %c0_2 = arith.constant 0 : index
    %c0_3 = arith.constant 0 : index
    %3 = vector.load %arg3[%c0, %c0_1, %c0_2, %c0_3] : memref<2x1x16x16xf32, #tpu.memory_space<vmem>>, vector<2x1x16x16xf32>
    %4 = vector.shape_cast %3 : vector<2x1x16x16xf32> to vector<2x16x16xf32>
    %c0_4 = arith.constant 0 : index
    %c0_5 = arith.constant 0 : index
    %c0_6 = arith.constant 0 : index
    %c0_7 = arith.constant 0 : index
    %5 = vector.load %arg4[%c0_4, %c0_5, %c0_6, %c0_7] : memref<2x1x16x16xf32, #tpu.memory_space<vmem>>, vector<2x1x16x16xf32>
    %6 = vector.shape_cast %5 : vector<2x1x16x16xf32> to vector<2x16x16xf32>
    %7 = arith.mulf %4, %6 : vector<2x16x16xf32>
    %8 = vector.shape_cast %7 : vector<2x16x16xf32> to vector<2x2x8x16xf32>
    %cst = arith.constant dense<0.000000e+00> : vector<8x16xf32>
    %9 = vector.multi_reduction <add>, %8, %cst [0, 1] : vector<2x2x8x16xf32> to vector<8x16xf32>
    %10 = arith.mulf %4, %4 : vector<2x16x16xf32>
    %11 = vector.shape_cast %10 : vector<2x16x16xf32> to vector<2x2x8x16xf32>
    %cst_8 = arith.constant dense<0.000000e+00> : vector<8x16xf32>
    %12 = vector.multi_reduction <add>, %11, %cst_8 [0, 1] : vector<2x2x8x16xf32> to vector<8x16xf32>
    %13 = arith.mulf %6, %6 : vector<2x16x16xf32>
    %14 = vector.shape_cast %13 : vector<2x16x16xf32> to vector<2x2x8x16xf32>
    %cst_9 = arith.constant dense<0.000000e+00> : vector<8x16xf32>
    %15 = vector.multi_reduction <add>, %14, %cst_9 [0, 1] : vector<2x2x8x16xf32> to vector<8x16xf32>
    %c0_10 = arith.constant 0 : index
    %c0_11 = arith.constant 0 : index
    %c0_12 = arith.constant 0 : index
    %c0_13 = arith.constant 0 : index
    %c0_14 = arith.constant 0 : index
    %16 = vector.load %arg5[%c0_10, %c0_11, %c0_12, %c0_13, %c0_14] : memref<1x1x3x8x16xf32, #tpu.memory_space<vmem>>, vector<1x1x3x8x16xf32>
    %17 = vector.shape_cast %16 : vector<1x1x3x8x16xf32> to vector<3x8x16xf32>
    %18 = vector.shape_cast %9 : vector<8x16xf32> to vector<1x8x16xf32>
    %19 = vector.shape_cast %12 : vector<8x16xf32> to vector<1x8x16xf32>
    %20 = vector.shape_cast %15 : vector<8x16xf32> to vector<1x8x16xf32>
    %21 = tpu.concatenate %18, %19, %20 in 0 : vector<1x8x16xf32>, vector<1x8x16xf32>, vector<1x8x16xf32> -> vector<3x8x16xf32>
    %22 = arith.addf %17, %21 : vector<3x8x16xf32>
    %c0_15 = arith.constant 0 : index
    %c0_16 = arith.constant 0 : index
    %c0_17 = arith.constant 0 : index
    %c0_18 = arith.constant 0 : index
    %c0_19 = arith.constant 0 : index
    %23 = vector.load %arg5[%c0_15, %c0_16, %c0_17, %c0_18, %c0_19] : memref<1x1x3x8x16xf32, #tpu.memory_space<vmem>>, vector<1x1x3x8x16xf32>
    %24 = vector.shape_cast %23 : vector<1x1x3x8x16xf32> to vector<3x8x16xf32>
    %25 = vector.shape_cast %22 : vector<3x8x16xf32> to vector<1x1x3x8x16xf32>
    tpu.vector_store %arg5[%c0_15, %c0_16, %c0_17, %c0_18, %c0_19], %25 {strides = array<i32>} : memref<1x1x3x8x16xf32, #tpu.memory_space<vmem>>, vector<1x1x3x8x16xf32>,
    return
  }
  func.func @transform_0(%arg0: i32, %arg1: i32, %arg2: i32) -> (i32, i32, i32, i32) {
    %c0_i32 = arith.constant 0 : i32
    %c0_i32_0 = arith.constant 0 : i32
    return %arg1, %arg0, %arg2, %c0_i32 : i32, i32, i32, i32
  }
  func.func @transform_1(%arg0: i32, %arg1: i32, %arg2: i32) -> (i32, i32, i32, i32) {
    %c0_i32 = arith.constant 0 : i32
    %c0_i32_0 = arith.constant 0 : i32
    return %arg1, %arg0, %arg2, %c0_i32 : i32, i32, i32, i32
  }
  func.func @transform_2(%arg0: i32, %arg1: i32, %arg2: i32) -> (i32, i32, i32, i32, i32) {
    %c0_i32 = arith.constant 0 : i32
    %c0_i32_0 = arith.constant 0 : i32
    %c0_i32_1 = arith.constant 0 : i32
    %c0_i32_2 = arith.constant 0 : i32
    return %arg0, %arg1, %c0_i32, %c0_i32_0, %c0_i32_1 : i32, i32, i32, i32, i32
  }
}

</mosaic_0001>

<llo_original>
// kernel: tpu_custom_call.1
$region0: #{tpu_custom_call.1}
  #allocation0 [shape = 'u32[]', space=smem, size = 0x4, offset = 0x4, fixed_abs, tag = 'smem constant byte address 0x4 - core index']
  #allocation1 [shape = 'u32[144,128]{1,0:T(1,128)}', space=vmem, size = 0x12000, scoped, tag = 'internal scratch']
  #allocation8 [shape = 's32[]', space=sflag, size = 0x4, offset = 0, fixed_abs, tag = 'sflag constant byte address 0x0 - dummy sync flag']
  #allocation10 [shape = 's32[]', space=sflag, size = 0x4, offset = 0, fixed_abs, tag = 'sflag constant byte address 0x0 - dummy sync flag']
  %s0 = inlined_call_operand.hbm [shape: f32[2,4,16,16], index: 0, kind: input, shape index: {}]
  %s1 = inlined_call_operand.hbm [shape: f32[2,4,16,16], index: 1, kind: input, shape index: {}]
  %s2 = inlined_call_operand.hbm [shape: f32[4,1,3,8,16], index: 2, kind: output, shape index: {}]
  %s3 = sld [smem:[#allocation0]]
  $region53: #{tpu_custom_call.1} parent=0
    _
  %s5 = ssub.s32 1, %s3
  %s6 = scalar_select 0, %s5, %s3
  $region1: #{tpu_custom_call.1} parent=0
    #allocation2 [shape = 'u8[32768]{0}', space=vmem, size = 0x8000, scoped, tag = 'input window, operand 0']
    #allocation3 [shape = 's32[2]{0}', space=sflag, size = 0x8, scoped, tag = 'scoped memory for tpu_custom_call.1']
    #allocation4 [shape = 's32[2]{0}', space=sflag, size = 0x8, scoped, tag = 'scoped memory for tpu_custom_call.1']
    #allocation5 [shape = 'u8[32768]{0}', space=vmem, size = 0x8000, scoped, tag = 'input window, operand 1']
    #allocation6 [shape = 's32[2]{0}', space=sflag, size = 0x8, scoped, tag = 'scoped memory for tpu_custom_call.1']
    #allocation7 [shape = 'u8[24576]{0}', space=vmem, size = 0x6000, scoped, tag = 'output window, operand 0']
    %7 = vsyncpa [#allocation3], 0
    %s8 = scalar_lea.sflag [#allocation3], 1
    %9 = vsyncpa %s8, 0
    %10 = vsyncpa [#allocation6], 0
    %s11 = scalar_lea.sflag [#allocation6], 1
    %12 = vsyncpa %s11, 0
    %13 = vsyncpa [#allocation4], 0
    %s14 = scalar_lea.sflag [#allocation4], 1
    %15 = vsyncpa %s14, 0
    loop: start=0, step=1, limit=6
    $region2: #{tpu_custom_call.1} parent=1 // loop_pre_header
      _
    $region3: #{tpu_custom_call.1} parent=1 // loop_header
      %s17 = sphi 0, %s21
      %p18 = scmp.ge.s32.totalorder %s17, 6
      %s24 = sphi 0, %s43
      %s25 = sphi 0, %s39
      %s26 = sphi 0, %s35
      %s27 = sphi 0, %s24
      %s28 = sphi 0, %s25
      %s29 = sphi 0, %s26
      %s30 = sphi 0, %s27
      %s31 = sphi 0, %s28
      %s32 = sphi 0, %s29
      %s50 = sphi 0, %s52
      %s53 = sphi 0, %s50
      %s54 = sphi 0, %s53
      %s70 = sphi 0, %s54
      %s80 = sphi 0, %s82
      %s83 = sphi 0, %s80
      %s84 = sphi 0, %s83
      %s100 = sphi 0, %s84
      %s108 = sphi 0, %s110
      %s111 = sphi 0, %s108
      %s112 = sphi 0, %s111
      %s128 = sphi 0, %s112
    $region4: #{tpu_custom_call.1} parent=1 // loop_header_branch
      %20 = sbr.rel (%p18) target = $region8
    $region5: #{tpu_custom_call.1} parent=1 // loop_body
      %s22 = ssub.s32 %s17, 1
      %s23 = ssub.s32 %s17, 2
      %s33 = sadd.s32 1, %s26
      %p34 = scmp.ge.s32.totalorder %s33, 1
      %s35 = scalar_select %p34, 0, %s33
      %s36 = sadd.s32 1, %s25
      %s37 = scalar_select %p34, %s36, %s25
      %p38 = scmp.ge.s32.totalorder %s37, 1
      %s39 = scalar_select %p38, 0, %s37
      %s40 = sadd.s32 1, %s24
      %s41 = scalar_select %p38, %s40, %s24
      %p42 = scmp.ge.s32.totalorder %s41, 4
      %s43 = scalar_select %p42, 0, %s41
      %s44 = ssub.s32 %s25, %s39
      %s45 = ssub.s32 %s24, %s43
      %s46 = sor.u32 %s44, %s45
      %s47 = ssub.s32 %s26, %s35
      %s48 = sor.u32 %s46, %s47
      %p49 = scmp.eq.s32.totalorder %s48, 0
      %s51 = sadd.s32 %s50, 1
      %s52 = scalar_select %p49, %s50, %s51
      %p55 = pneg %p49
      %p56 = scmp.eq.s32.totalorder %s17, 3
      %p57 = por %p55, %p56
      %p58 = scmp.ne.s32.totalorder %s50, %s53
      %p59 = scmp.eq.s32.totalorder %s17, 0
      %p60 = por %p58, %p59
      %p61 = scmp.ne.s32.totalorder %s50, %s53
      %p62 = scmp.eq.s32.totalorder %s22, 3
      %p63 = por %p61, %p62
      %p64 = scmp.ne.s32.totalorder %s53, %s54
      %p65 = scmp.eq.s32.totalorder %s22, 0
      %p66 = por %p64, %p65
      %p67 = scmp.ne.s32.totalorder %s53, %s54
      %p68 = scmp.eq.s32.totalorder %s23, 3
      %p69 = por %p67, %p68
      %p71 = scmp.ne.s32.totalorder %s54, %s70
      %p72 = scmp.eq.s32.totalorder %s23, 0
      %p73 = por %p71, %p72
      %s74 = ssub.s32 %s25, %s39
      %s75 = ssub.s32 %s24, %s43
      %s76 = sor.u32 %s74, %s75
      %s77 = ssub.s32 %s26, %s35
      %s78 = sor.u32 %s76, %s77
      %p79 = scmp.eq.s32.totalorder %s78, 0
      %s81 = sadd.s32 %s80, 1
      %s82 = scalar_select %p79, %s80, %s81
      %p85 = pneg %p79
      %p86 = scmp.eq.s32.totalorder %s17, 3
      %p87 = por %p85, %p86
      %p88 = scmp.ne.s32.totalorder %s80, %s83
      %p89 = scmp.eq.s32.totalorder %s17, 0
      %p90 = por %p88, %p89
      %p91 = scmp.ne.s32.totalorder %s80, %s83
      %p92 = scmp.eq.s32.totalorder %s22, 3
      %p93 = por %p91, %p92
      %p94 = scmp.ne.s32.totalorder %s83, %s84
      %p95 = scmp.eq.s32.totalorder %s22, 0
      %p96 = por %p94, %p95
      %p97 = scmp.ne.s32.totalorder %s83, %s84
      %p98 = scmp.eq.s32.totalorder %s23, 3
      %p99 = por %p97, %p98
      %p101 = scmp.ne.s32.totalorder %s84, %s100
      %p102 = scmp.eq.s32.totalorder %s23, 0
      %p103 = por %p101, %p102
      %s104 = ssub.s32 %s24, %s43
      %s105 = ssub.s32 %s25, %s39
      %s106 = sor.u32 %s104, %s105
      %p107 = scmp.eq.s32.totalorder %s106, 0
      %s109 = sadd.s32 %s108, 1
      %s110 = scalar_select %p107, %s108, %s109
      %p113 = pneg %p107
      %p114 = scmp.eq.s32.totalorder %s17, 3
      %p115 = por %p113, %p114
      %p116 = scmp.ne.s32.totalorder %s108, %s111
      %p117 = scmp.eq.s32.totalorder %s17, 0
      %p118 = por %p116, %p117
      %p119 = scmp.ne.s32.totalorder %s108, %s111
      %p120 = scmp.eq.s32.totalorder %s22, 3
      %p121 = por %p119, %p120
      %p122 = scmp.ne.s32.totalorder %s111, %s112
      %p123 = scmp.eq.s32.totalorder %s22, 0
      %p124 = por %p122, %p123
      %p125 = scmp.ne.s32.totalorder %s111, %s112
      %p126 = scmp.eq.s32.totalorder %s23, 3
      %p127 = por %p125, %p126
      %p129 = scmp.ne.s32.totalorder %s112, %s128
      %p130 = scmp.eq.s32.totalorder %s23, 0
      %p131 = por %p129, %p130
      %p132 = scmp.le.s32.totalorder 1, %s17
      %p133 = scmp.lt.s32.totalorder %s17, 5
      %p134 = pnand %p132, %p133
      %p135 = pneg %p134
      // Predicated region
      $region9: #{tpu_custom_call.1} parent=5 // pred_check
        _
      $region10: #{tpu_custom_call.1} parent=5 // pred_check_branch
        %137 = sbr.rel (%p134) target = $region12
      $region11: #{tpu_custom_call.1} parent=5 // pred_region
        %s138 = ssub.s32 %s17, 1
      $region12: #{tpu_custom_call.1} parent=5 // pred_fallthru
        _
      %p139 = scmp.lt.s32.totalorder %s17, 4
      // Predicated region
      $region13: #{tpu_custom_call.1} parent=5 // pred_check
        %p140 = pneg %p139
      $region14: #{tpu_custom_call.1} parent=5 // pred_check_branch
        %142 = sbr.rel (%p140) target = $region16
      $region15: #{tpu_custom_call.1} parent=5 // pred_region
        // Predicated region
        $region17: #{tpu_custom_call.1} parent=15 // pred_check
          %p143 = pneg %p60
        $region18: #{tpu_custom_call.1} parent=15 // pred_check_branch
          %145 = sbr.rel (%p143) target = $region20
        $region19: #{tpu_custom_call.1} parent=15 // pred_region
          #allocation9 [shape = 'u32[6]{0}', space=smem, size = 0x18, scoped, tag = 'DMA stride descriptor']
          %s146 = sand.u32 %s50, 1
          %s147 = scalar_lea.sflag [#allocation3], %s146
          %s148 = sand.u32 %s50, 1
          %s149 = smul.addr %s148, 32
          %s150 = scalar_lea.vmem [#allocation2], %s149
          %s151 = smul.u32 2, %s25
          %s152 = smul.u32 2, %s26
          %s154 = ssub.s32 512, 512
          %155 = vsyncadd %s147, %s154
          %s156 = smul.addr %s24, 2
          %s157 = sadd.s32 %s152, %s156
          %s158 = smul.addr %s151, 8
          %s159 = sadd.s32 %s157, %s158
          %s160 = smul.addr %s159, 128
          %s161 = scalar_lea.hbm %s0, %s160
          %s163 = sshll.u32 1, 14
          %s164 = sxor.u32 4294967295, %s163
          %s166 = sld [smem:[#allocation0]]
          %s167 = sadd.s32 2, %s166
          %s169 = sshll.u32 7, 26
          %s170 = sxor.u32 4294967295, %s169
          %s171 = sand.u32 0, %s170
          %s172 = sshll.u32 %s167, 26
          %s173 = sor.u32 %s171, %s172
          %s174 = sshll.u32 %s150, 4
          %s175 = int_to_ptr.vmem [resolvable:$true] %s174
          %181 = sst [smem:[#allocation9]] 1024
          %s182 = scalar_lea.smem [#allocation9], 1
          %183 = sst [smem:[%s182]] 256
          %s184 = scalar_lea.smem [#allocation9], 2
          %185 = sst [smem:[%s184]] 2
          %s186 = scalar_lea.smem [#allocation9], 3
          %187 = sst [smem:[%s186]] 128
          %s188 = scalar_lea.smem [#allocation9], 4
          %189 = sst [smem:[%s188]] 128
          %s190 = scalar_lea.smem [#allocation9], 5
          %191 = sst [smem:[%s190]] 8
          %193 = dma.general %s161, 512, %s175, %s147, 131072, [#allocation9], %s173, 0
        $region20: #{tpu_custom_call.1} parent=15 // pred_fallthru
          _
        // Predicated region
        $region21: #{tpu_custom_call.1} parent=15 // pred_check
          %p194 = pneg %p90
        $region22: #{tpu_custom_call.1} parent=15 // pred_check_branch
          %196 = sbr.rel (%p194) target = $region24
        $region23: #{tpu_custom_call.1} parent=15 // pred_region
          #allocation11 [shape = 'u32[6]{0}', space=smem, size = 0x18, scoped, tag = 'DMA stride descriptor']
          %s197 = sand.u32 %s80, 1
          %s198 = scalar_lea.sflag [#allocation6], %s197
          %s199 = sand.u32 %s80, 1
          %s200 = smul.addr %s199, 32
          %s201 = scalar_lea.vmem [#allocation5], %s200
          %s202 = smul.u32 2, %s25
          %s203 = smul.u32 2, %s26
          %s205 = ssub.s32 512, 512
          %206 = vsyncadd %s198, %s205
          %s207 = smul.addr %s24, 2
          %s208 = sadd.s32 %s203, %s207
          %s209 = smul.addr %s202, 8
          %s210 = sadd.s32 %s208, %s209
          %s211 = smul.addr %s210, 128
          %s212 = scalar_lea.hbm %s1, %s211
          %s214 = sshll.u32 1, 14
          %s215 = sxor.u32 4294967295, %s214
          %s217 = sld [smem:[#allocation0]]
          %s218 = sadd.s32 2, %s217
          %s220 = sshll.u32 7, 26
          %s221 = sxor.u32 4294967295, %s220
          %s222 = sand.u32 0, %s221
          %s223 = sshll.u32 %s218, 26
          %s224 = sor.u32 %s222, %s223
          %s225 = sshll.u32 %s201, 4
          %s226 = int_to_ptr.vmem [resolvable:$true] %s225
          %232 = sst [smem:[#allocation11]] 1024
          %s233 = scalar_lea.smem [#allocation11], 1
          %234 = sst [smem:[%s233]] 256
          %s235 = scalar_lea.smem [#allocation11], 2
          %236 = sst [smem:[%s235]] 2
          %s237 = scalar_lea.smem [#allocation11], 3
          %238 = sst [smem:[%s237]] 128
          %s239 = scalar_lea.smem [#allocation11], 4
          %240 = sst [smem:[%s239]] 128
          %s241 = scalar_lea.smem [#allocation11], 5
          %242 = sst [smem:[%s241]] 8
          %244 = dma.general %s212, 512, %s226, %s198, 131072, [#allocation11], %s224, 0
        $region24: #{tpu_custom_call.1} parent=15 // pred_fallthru
          _
      $region16: #{tpu_custom_call.1} parent=5 // pred_fallthru
        _
      %p245 = scmp.le.s32.totalorder 1, %s17
      %p246 = scmp.lt.s32.totalorder %s17, 5
      %p247 = pnand %p245, %p246
      %p248 = pneg %p247
      // Predicated region
      $region25: #{tpu_custom_call.1} parent=5 // pred_check
        _
      $region26: #{tpu_custom_call.1} parent=5 // pred_check_branch
        %250 = sbr.rel (%p247) target = $region28
      $region27: #{tpu_custom_call.1} parent=5 // pred_region
        %s251 = ssub.s32 %s17, 1
        %s252 = sand.u32 %s53, 1
        %s253 = scalar_lea.sflag [#allocation3], %s252
        %s254 = sand.u32 %s53, 1
        %s255 = smul.addr %s254, 32
        %s256 = scalar_lea.vmem [#allocation2], %s255
        // Predicated region
        $region29: #{tpu_custom_call.1} parent=27 // pred_check
          %p257 = pneg %p66
        $region30: #{tpu_custom_call.1} parent=27 // pred_check_branch
          %259 = sbr.rel (%p257) target = $region32
        $region31: #{tpu_custom_call.1} parent=27 // pred_region
          %260 = dma.done %s253, 512
        $region32: #{tpu_custom_call.1} parent=27 // pred_fallthru
          _
        %s261 = sand.u32 %s83, 1
        %s262 = scalar_lea.sflag [#allocation6], %s261
        %s263 = sand.u32 %s83, 1
        %s264 = smul.addr %s263, 32
        %s265 = scalar_lea.vmem [#allocation5], %s264
        // Predicated region
        $region33: #{tpu_custom_call.1} parent=27 // pred_check
          %p266 = pneg %p96
        $region34: #{tpu_custom_call.1} parent=27 // pred_check_branch
          %268 = sbr.rel (%p266) target = $region36
        $region35: #{tpu_custom_call.1} parent=27 // pred_region
          %269 = dma.done %s262, 512
        $region36: #{tpu_custom_call.1} parent=27 // pred_fallthru
          _
        %s270 = sand.u32 %s53, 1
        %s271 = scalar_lea.sflag [#allocation3], %s270
        %s272 = sand.u32 %s53, 1
        %s273 = smul.addr %s272, 32
        %s274 = scalar_lea.vmem [#allocation2], %s273
        %p275 = pneg %p66
        %p276 = pneg %p63
        %s277 = sand.u32 %s83, 1
        %s278 = scalar_lea.sflag [#allocation6], %s277
        %s279 = sand.u32 %s83, 1
        %s280 = smul.addr %s279, 32
        %s281 = scalar_lea.vmem [#allocation5], %s280
        %p282 = pneg %p96
        %p283 = pneg %p93
        %p284 = pneg %p124
        %p285 = pneg %p121
        %s286 = sand.u32 %s111, 1
        %s287 = scalar_lea.sflag [#allocation4], %s286
        %s288 = sand.u32 %s111, 1
        %s289 = smul.addr %s288, 24
        %s290 = scalar_lea.vmem [#allocation7], %s289
        %s291 = smul.u32 2, %s28
        %s292 = smul.u32 2, %s29
        %s293 = smul.u32 2, %s28
        %s294 = smul.u32 2, %s29
        %p295 = scmp.eq.s32.totalorder %s29, 0
        // Predicated region
        $region37: #{tpu_custom_call.1} parent=27 // pred_check
          %p296 = pneg %p295
        $region38: #{tpu_custom_call.1} parent=27 // pred_check_branch
          %298 = sbr.rel (%p296) target = $region40
        $region39: #{tpu_custom_call.1} parent=27 // pred_region
          %vm299 = vcmask 130048
          %300 = vst.msk [vmem:[%s290] sm:$0xff] %vm299, 0.0
          %301 = vst.msk [vmem:[%s290 + $0x8] sm:$0xff] %vm299, 0.0
          %302 = vst.msk [vmem:[%s290 + $0x10] sm:$0xff] %vm299, 0.0
        $region40: #{tpu_custom_call.1} parent=27 // pred_fallthru
          _
        %v303 = vld [vmem:[%s256] sm:$0xff]
        %v304 = vld [vmem:[%s256 + $0x8] sm:$0xff]
        %v305 = vld [vmem:[%s256 + $0x10] sm:$0xff]
        %v306 = vld [vmem:[%s256 + $0x18] sm:$0xff]
        %v307 = vld [vmem:[%s265] sm:$0xff]
        %v308 = vld [vmem:[%s265 + $0x8] sm:$0xff]
        %v309 = vld [vmem:[%s265 + $0x10] sm:$0xff]
        %v310 = vld [vmem:[%s265 + $0x18] sm:$0xff]
        %v311 = vmul.f32 %v303, %v307
        %v312 = vmul.f32 %v304, %v308
        %v313 = vmul.f32 %v305, %v309
        %v314 = vmul.f32 %v306, %v310
        %vm315 = vcmask 130048
        %v316 = vsel %vm315, %v311, 0.0
        %v317 = vsel %vm315, %v312, 0.0
        %v318 = vadd.f32 %v316, %v317
        %v319 = vsel %vm315, %v313, 0.0
        %v320 = vadd.f32 %v318, %v319
        %v321 = vsel %vm315, %v314, 0.0
        %v322 = vadd.f32 %v320, %v321
        %v323 = vmul.f32 %v303, %v303
        %v324 = vmul.f32 %v304, %v304
        %v325 = vmul.f32 %v305, %v305
        %v326 = vmul.f32 %v306, %v306
        %v327 = vsel %vm315, %v323, 0.0
        %v328 = vsel %vm315, %v324, 0.0
        %v329 = vadd.f32 %v327, %v328
        %v330 = vsel %vm315, %v325, 0.0
        %v331 = vadd.f32 %v329, %v330
        %v332 = vsel %vm315, %v326, 0.0
        %v333 = vadd.f32 %v331, %v332
        %v334 = vmul.f32 %v307, %v307
        %v335 = vmul.f32 %v308, %v308
        %v336 = vmul.f32 %v309, %v309
        %v337 = vmul.f32 %v310, %v310
        %v338 = vsel %vm315, %v334, 0.0
        %v339 = vsel %vm315, %v335, 0.0
        %v340 = vadd.f32 %v338, %v339
        %v341 = vsel %vm315, %v336, 0.0
        %v342 = vadd.f32 %v340, %v341
        %v343 = vsel %vm315, %v337, 0.0
        %v344 = vadd.f32 %v342, %v343
        %v345 = vld [vmem:[%s290] sm:$0xff]
        %v346 = vld [vmem:[%s290 + $0x8] sm:$0xff]
        %v347 = vld [vmem:[%s290 + $0x10] sm:$0xff]
        %v348 = vadd.f32 %v345, %v322
        %v349 = vadd.f32 %v346, %v333
        %v350 = vadd.f32 %v347, %v344
        %351 = vst.msk [vmem:[%s290] sm:$0xff] %vm315, %v348
        %352 = vst.msk [vmem:[%s290 + $0x8] sm:$0xff] %vm315, %v349
        %353 = vst.msk [vmem:[%s290 + $0x10] sm:$0xff] %vm315, %v350
        %s354 = sand.u32 %s111, 1
        %s355 = scalar_lea.sflag [#allocation4], %s354
        %s356 = sand.u32 %s111, 1
        %s357 = smul.addr %s356, 24
        %s358 = scalar_lea.vmem [#allocation7], %s357
        // Predicated region
        $region41: #{tpu_custom_call.1} parent=27 // pred_check
          %p359 = pneg %p121
        $region42: #{tpu_custom_call.1} parent=27 // pred_check_branch
          %361 = sbr.rel (%p359) target = $region44
        $region43: #{tpu_custom_call.1} parent=27 // pred_region
          %s363 = ssub.s32 384, 384
          %364 = vsyncadd %s355, %s363
          %s365 = smul.addr %s28, 3
          %s366 = smul.addr %s27, 3
          %s367 = sadd.s32 %s365, %s366
          %s368 = smul.addr %s367, 128
          %s369 = scalar_lea.hbm %s2, %s368
          %s370 = sshll.u32 %s358, 4
          %s371 = int_to_ptr.vmem [resolvable:$true] %s370
          %376 = dma.vmem_to_hbm [thread:$0]  %s371, 384, %s369, %s355, 128, 128, 8
        $region44: #{tpu_custom_call.1} parent=27 // pred_fallthru
          _
      $region28: #{tpu_custom_call.1} parent=5 // pred_fallthru
        _
      %p377 = scmp.le.s32.totalorder 2, %s17
      // Predicated region
      $region45: #{tpu_custom_call.1} parent=5 // pred_check
        %p378 = pneg %p377
      $region46: #{tpu_custom_call.1} parent=5 // pred_check_branch
        %380 = sbr.rel (%p378) target = $region48
      $region47: #{tpu_custom_call.1} parent=5 // pred_region
        %s381 = ssub.s32 %s17, 2
        // Predicated region
        $region49: #{tpu_custom_call.1} parent=47 // pred_check
          %p382 = pneg %p127
        $region50: #{tpu_custom_call.1} parent=47 // pred_check_branch
          %384 = sbr.rel (%p382) target = $region52
        $region51: #{tpu_custom_call.1} parent=47 // pred_region
          %s385 = sand.u32 %s112, 1
          %s386 = scalar_lea.sflag [#allocation4], %s385
          %s387 = sand.u32 %s112, 1
          %s388 = smul.addr %s387, 24
          %s389 = scalar_lea.vmem [#allocation7], %s388
          %390 = dma.done %s386, 384
        $region52: #{tpu_custom_call.1} parent=47 // pred_fallthru
          _
      $region48: #{tpu_custom_call.1} parent=5 // pred_fallthru
        _
    $region6: #{tpu_custom_call.1} parent=1 // loop_footer
      %s21 = sadd.s32 1, %s17
    $region7: #{tpu_custom_call.1} parent=1 // loop_footer_branch
      %16 = sbr.rel target = $region3
    $region8: #{tpu_custom_call.1} parent=1 // loop_exit
      _
    %391 = vsyncpa [#allocation3], 1
    %s392 = scalar_lea.sflag [#allocation3], 1
    %393 = vsyncpa %s392, 1
    %394 = vsyncpa [#allocation6], 1
    %s395 = scalar_lea.sflag [#allocation6], 1
    %396 = vsyncpa %s395, 1
    %397 = vsyncpa [#allocation4], 1
    %s398 = scalar_lea.sflag [#allocation4], 1
    %399 = vsyncpa %s398, 1

</llo_original>
